<compile_context>
chip_gen: v7x
topology: tpu7x:2x2x1
jax: 0.10.0
libtpu: 0.0.40
codegen_flags: <defaults>
</compile_context>

<pallas_src>
import functools

import jax
import jax.numpy as jnp
from jax.experimental import pallas as pl
from jax.experimental.pallas import tpu as pltpu

_LANE = 128
_MIB = 1024 * 1024


# --------------------------------------------------------------------------
# Kernels
# --------------------------------------------------------------------------
def _mask_kernel(x_ref, s_ref, out_ref, *, value):
    x = x_ref[...].astype(jnp.float32)
    s = s_ref[...].astype(jnp.float32)
    out_ref[...] = (x * s + value * (1.0 - s)).astype(out_ref.dtype)


def _mask_append_2d_kernel(x_ref, s_ref, out_ref, *, value, F):
    # Lane-aligned path (F % 128 == 0): out block is (TB, 2F); both stores are
    # full-width and 128-lane aligned (no masked vst, no wrapper reshape).
    x = x_ref[...].astype(jnp.float32)
    s = s_ref[...].astype(jnp.float32)
    masked = x * s + value * (1.0 - s)
    out_ref[:, :F] = masked.astype(out_ref.dtype)
    out_ref[:, F:] = s_ref[...].astype(out_ref.dtype)   # single native->out cast


def _mask_append_3d_kernel(x_ref, s_ref, out_ref, *, value):
    # Fallback path for arbitrary F: out block is (TB, 2, F).
    x = x_ref[...].astype(jnp.float32)
    s = s_ref[...].astype(jnp.float32)
    masked = x * s + value * (1.0 - s)
    out_ref[:, 0, :] = masked.astype(out_ref.dtype)
    out_ref[:, 1, :] = s_ref[...].astype(out_ref.dtype)  # no f32 round trip


# --------------------------------------------------------------------------
# Tiling / VMEM budgeting helpers
# --------------------------------------------------------------------------
def _padded_lanes(n):
    return ((n + _LANE - 1) // _LANE) * _LANE


def _sublane_pack(dtype):
    # Sublane packing multiple: 8 rows (f32), 16 (bf16/f16), 32 (int8/bool/fp8).
    return max(8, 32 // jnp.dtype(dtype).itemsize)


def _vmem_budget_and_limit():
    """Generation-aware (budget for double-buffered working set, vmem limit)."""
    cap = 64 * _MIB  # conservative fallback: v7x per-TensorCore VMEM
    try:
        info = pltpu.get_tpu_info()
        cap = int(getattr(info, "vmem_capacity_bytes", cap)) or cap
    except Exception:
        pass
    budget = min(48 * _MIB, (cap * 7) // 10)     # ~45 MiB on v7x, 48 MiB on v5e/v6e
    limit = min(cap, budget + 12 * _MIB)         # always below physical VMEM
    return budget, limit


def _pick_batch_tile(B, F, x_dtype, s_dtype, append, aligned_append, budget):
    """Largest TB whose double-buffered (x, S, out) blocks fit the budget,
    accounting for lane (128) and sublane padding of the real VMEM tiles."""
    x_item = jnp.dtype(x_dtype).itemsize
    s_item = jnp.dtype(s_dtype).itemsize
    lanes_f = _padded_lanes(F)

    row_bytes = lanes_f * x_item + lanes_f * s_item        # x block + S block
    if append:
        if aligned_append:
            row_bytes += 2 * F * x_item                    # (TB, 2F), 2F % 128 == 0
        else:
            # (TB, 2, F): the size-2 second-minor axis pads to a full sub-tile
            # (8/16/32 rows), i.e. 32 bytes per padded lane regardless of dtype.
            row_bytes += 32 * lanes_f
    else:
        row_bytes += lanes_f * x_item

    tb = budget // (2 * row_bytes)                         # 2x: double buffering
    if tb >= B:
        return B                                           # full extent is legal
    pack = max(_sublane_pack(x_dtype), _sublane_pack(s_dtype))
    return max(pack, (tb // pack) * pack)


# --------------------------------------------------------------------------
# Wrapper
# --------------------------------------------------------------------------
def mask_layer_1d(x, S, value=0.5, append=True):
    """Pallas implementation of MaskLayer1d.forward((x, S))."""
    assert x.ndim == 2 and x.shape == S.shape
    B, F = x.shape
    value = float(value)

    # Keep S narrow in HBM; only re-label bool as int8 (same byte width) since
    # 1-byte integer refs are the Mosaic-friendly representation of a mask.
    if S.dtype == jnp.bool_:
        S = S.astype(jnp.int8)

    budget, vmem_limit = _vmem_budget_and_limit()
    aligned_append = append and (F % _LANE == 0)
    TB = _pick_batch_tile(B, F, x.dtype, S.dtype, append, aligned_append, budget)
    grid = (pl.cdiv(B, TB),)

    in_specs = [
        pl.BlockSpec((TB, F), lambda i: (i, 0)),
        pl.BlockSpec((TB, F), lambda i: (i, 0)),
    ]

    x_item = jnp.dtype(x.dtype).itemsize
    s_item = jnp.dtype(S.dtype).itemsize

    if append:
        if aligned_append:
            out_shape = jax.ShapeDtypeStruct((B, 2 * F), x.dtype)
            out_spec = pl.BlockSpec((TB, 2 * F), lambda i: (i, 0))
            kernel = functools.partial(_mask_append_2d_kernel, value=value, F=F)
        else:
            out_shape = jax.ShapeDtypeStruct((B, 2, F), x.dtype)
            out_spec = pl.BlockSpec((TB, 2, F), lambda i: (i, 0, 0))
            kernel = functools.partial(_mask_append_3d_kernel, value=value)
        out_bytes = 2 * B * F * x_item
    else:
        out_shape = jax.ShapeDtypeStruct((B, F), x.dtype)
        out_spec = pl.BlockSpec((TB, F), lambda i: (i, 0))
        kernel = functools.partial(_mask_kernel, value=value)
        out_bytes = B * F * x_item

    out = pl.pallas_call(
        kernel,
        out_shape=out_shape,
        grid=grid,
        in_specs=in_specs,
        out_specs=out_spec,
        compiler_params=pltpu.CompilerParams(
            dimension_semantics=("parallel",),
            vmem_limit_bytes=vmem_limit,
        ),
        cost_estimate=pl.CostEstimate(
            flops=4 * B * F,
            transcendentals=0,
            bytes_accessed=B * F * (x_item + s_item) + out_bytes,
        ),
    )(x, S)

    if append and not aligned_append:
        # (B, 2, F) -> (B, 2F): row-major contiguous => [masked | S] per row.
        out = out.reshape(B, 2 * F)
    return out


# --------------------------------------------------------------------------
# Reference + self-test
# --------------------------------------------------------------------------
def _reference(x, S, value, append):
    sf = S.astype(jnp.float32)
    xf = x.astype(jnp.float32)
    out = (xf * sf + value * (1.0 - sf)).astype(x.dtype)
    if append:
        out = jnp.concatenate([out, sf.astype(x.dtype)], axis=1)
    return out


if __name__ == "__main__":
    key = jax.random.PRNGKey(0)
    kx, ks, kx2, ks2 = jax.random.split(key, 4)
    VALUE = 0.5

    # Small tabular case (typical fastshap): F not a multiple of 128.
    B, F = 2, 32
    x = jax.random.normal(kx, (B, F), dtype=jnp.float32)
    S = jax.random.bernoulli(ks, p=0.5, shape=(B, F)).astype(jnp.float32)

    out_append = jax.block_until_ready(mask_layer_1d(x, S, value=VALUE, append=True))
    assert out_append.shape == (B, 2 * F)
    assert jnp.allclose(out_append, _reference(x, S, VALUE, True), atol=1e-6)

    out_plain = jax.block_until_ready(mask_layer_1d(x, S, value=VALUE, append=False))
    assert out_plain.shape == (B, F)
    assert jnp.allclose(out_plain, _reference(x, S, VALUE, False), atol=1e-6)

    # Boolean mask stays 1 byte in HBM (cast happens on vregs inside the kernel).
    S_bool = jax.random.bernoulli(ks, p=0.5, shape=(B, F))
    out_bool = jax.block_until_ready(mask_layer_1d(x, S_bool, value=VALUE, append=True))
    assert jnp.allclose(out_bool, _reference(x, S_bool, VALUE, True), atol=1e-6)

    # Lane-aligned append path (F % 128 == 0): single (B, 2F) output block.
    B2, F2 = 16, 128
    x2 = jax.random.normal(kx2, (B2, F2), dtype=jnp.float32)
    S2 = jax.random.bernoulli(ks2, p=0.5, shape=(B2, F2)).astype(jnp.float32)
    out2 = jax.block_until_ready(mask_layer_1d(x2, S2, value=VALUE, append=True))
    assert out2.shape == (B2, 2 * F2)
    assert jnp.allclose(out2, _reference(x2, S2, VALUE, True), atol=1e-6)

    print("KERNEL_OK")
</pallas_src>

<mosaic_0001>
module attributes {stable_mosaic.version = 11 : i64} {
  func.func @_mask_append_3d_kernel(%arg0: i32, %arg1: memref<2x32xf32, #tpu.memory_space<vmem>>, %arg2: memref<2x32xf32, #tpu.memory_space<vmem>>, %arg3: memref<2x2x32xf32, #tpu.memory_space<vmem>>) attributes {dimension_semantics = [#tpu.dimension_semantics<parallel>], iteration_bounds = array<i64: 1>, scalar_prefetch = 0 : i64, scratch_operands = 0 : i64, tpu.core_type = #tpu.core_type<tc>, window_params = [{transform_indices = @transform_0, window_bounds = array<i64: 2, 32>}, {transform_indices = @transform_1, window_bounds = array<i64: 2, 32>}, {transform_indices = @transform_2, window_bounds = array<i64: 2, 2, 32>}]} {
    %c0 = arith.constant 0 : index
    %c0_0 = arith.constant 0 : index
    %0 = vector.load %arg1[%c0, %c0_0] : memref<2x32xf32, #tpu.memory_space<vmem>>, vector<2x32xf32>
    %c0_1 = arith.constant 0 : index
    %c0_2 = arith.constant 0 : index
    %1 = vector.load %arg2[%c0_1, %c0_2] : memref<2x32xf32, #tpu.memory_space<vmem>>, vector<2x32xf32>
    %2 = arith.mulf %0, %1 : vector<2x32xf32>
    %cst = arith.constant 1.000000e+00 : f32
    %3 = vector.broadcast %cst : f32 to vector<2x32xf32>
    %4 = arith.subf %3, %1 : vector<2x32xf32>
    %cst_3 = arith.constant 5.000000e-01 : f32
    %5 = vector.broadcast %cst_3 : f32 to vector<2x32xf32>
    %6 = arith.mulf %5, %4 : vector<2x32xf32>
    %7 = arith.addf %2, %6 : vector<2x32xf32>
    %c0_4 = arith.constant 0 : index
    %c0_5 = arith.constant 0 : index
    %c0_6 = arith.constant 0 : index
    %8 = vector.load %arg3[%c0_4, %c0_5, %c0_6] : memref<2x2x32xf32, #tpu.memory_space<vmem>>, vector<2x1x32xf32>
    %9 = vector.shape_cast %8 : vector<2x1x32xf32> to vector<2x32xf32>
    %10 = vector.shape_cast %7 : vector<2x32xf32> to vector<2x1x32xf32>
    tpu.vector_store %arg3[%c0_4, %c0_5, %c0_6], %10 {strides = array<i32>} : memref<2x2x32xf32, #tpu.memory_space<vmem>>, vector<2x1x32xf32>,
    %c0_7 = arith.constant 0 : index
    %c0_8 = arith.constant 0 : index
    %11 = vector.load %arg2[%c0_7, %c0_8] : memref<2x32xf32, #tpu.memory_space<vmem>>, vector<2x32xf32>
    %c0_9 = arith.constant 0 : index
    %c1 = arith.constant 1 : index
    %c0_10 = arith.constant 0 : index
    %12 = vector.load %arg3[%c0_9, %c1, %c0_10] : memref<2x2x32xf32, #tpu.memory_space<vmem>>, vector<2x1x32xf32>
    %13 = vector.shape_cast %12 : vector<2x1x32xf32> to vector<2x32xf32>
    %14 = vector.shape_cast %11 : vector<2x32xf32> to vector<2x1x32xf32>
    tpu.vector_store %arg3[%c0_9, %c1, %c0_10], %14 {strides = array<i32>} : memref<2x2x32xf32, #tpu.memory_space<vmem>>, vector<2x1x32xf32>,
    return
  }
  func.func @transform_0(%arg0: i32) -> (i32, i32) {
    %c0_i32 = arith.constant 0 : i32
    %c0_i32_0 = arith.constant 0 : i32
    return %arg0, %c0_i32 : i32, i32
  }
  func.func @transform_1(%arg0: i32) -> (i32, i32) {
    %c0_i32 = arith.constant 0 : i32
    %c0_i32_0 = arith.constant 0 : i32
    return %arg0, %c0_i32 : i32, i32
  }
  func.func @transform_2(%arg0: i32) -> (i32, i32, i32) {
    %c0_i32 = arith.constant 0 : i32
    %c0_i32_0 = arith.constant 0 : i32
    %c0_i32_1 = arith.constant 0 : i32
    return %arg0, %c0_i32, %c0_i32_0 : i32, i32, i32
  }
}

</mosaic_0001>

<llo_original>
// kernel: tpu_custom_call.1
$region0: #{tpu_custom_call.1}
  #allocation0 [shape = 'u32[]', space=smem, size = 0x4, offset = 0x4, fixed_abs, tag = 'smem constant byte address 0x4 - core index']
  #allocation1 [shape = 'u32[144,128]{1,0:T(1,128)}', space=vmem, size = 0x12000, scoped, tag = 'internal scratch']
  %s0 = inlined_call_operand.hbm [shape: f32[2,32], index: 0, kind: input, shape index: {}]
  %s1 = inlined_call_operand.vmem [shape: f32[2,32], index: 1, kind: input, shape index: {}]
  %s2 = inlined_call_operand.hbm [shape: f32[2,2,32], index: 2, kind: output, shape index: {}]
  %s3 = sld [smem:[#allocation0]]
  $region22: #{tpu_custom_call.1} parent=0
    _
  %s5 = ssub.s32 1, %s3
  %s6 = scalar_select 0, %s5, %s3
  $region1: #{tpu_custom_call.1} parent=0
    #allocation2 [shape = 'u8[1024]{0}', space=vmem, size = 0x400, scoped, tag = 'input window, operand 0, single buffered']
    #allocation3 [shape = 's32[1]{0}', space=sflag, size = 0x4, scoped, tag = 'scoped memory for tpu_custom_call.1']
    #allocation4 [shape = 's32[1]{0}', space=sflag, size = 0x4, scoped, tag = 'scoped memory for tpu_custom_call.1']
    #allocation5 [shape = 'u8[2048]{0}', space=vmem, size = 0x800, scoped, tag = 'output window, operand 0, single buffered']
    %7 = vsyncpa [#allocation3], 0
    %8 = vsyncpa [#allocation4], 0
    // Predicated region
    $region2: #{tpu_custom_call.1} parent=1 // pred_check
      _
    $region3: #{tpu_custom_call.1} parent=1 // pred_check_branch
      %10 = sbr.rel (0) target = $region5
    $region4: #{tpu_custom_call.1} parent=1 // pred_region
      %s12 = ssub.s32 32, 32
      %13 = vsyncadd [#allocation3], %s12
      %s15 = sshll.u32 [#allocation2], 4
      %s16 = int_to_ptr.vmem [resolvable:$true] %s15
      %18 = dma.hbm_to_vmem [thread:$0]  %s0, 32, %s16, [#allocation3]
    $region5: #{tpu_custom_call.1} parent=1 // pred_fallthru
      _
    // Predicated region
    $region6: #{tpu_custom_call.1} parent=1 // pred_check
      _
    $region7: #{tpu_custom_call.1} parent=1 // pred_check_branch
      %20 = sbr.rel (0) target = $region9
    $region8: #{tpu_custom_call.1} parent=1 // pred_region
      _
    $region9: #{tpu_custom_call.1} parent=1 // pred_fallthru
      _
    // Predicated region
    $region10: #{tpu_custom_call.1} parent=1 // pred_check
      _
    $region11: #{tpu_custom_call.1} parent=1 // pred_check_branch
      %22 = sbr.rel (0) target = $region13
    $region12: #{tpu_custom_call.1} parent=1 // pred_region
      %23 = dma.done [#allocation3], 32
    $region13: #{tpu_custom_call.1} parent=1 // pred_fallthru
      _
    %v24 = vld [vmem:[#allocation2] sm:$0x3]
    %v25 = vld [vmem:[%s1] sm:$0x3]
    %v26 = vmul.f32 %v24, %v25
    %v27 = vsub.f32 1.0, %v25
    %v28 = vmul.f32 %v27, 0.5
    %v29 = vadd.f32 %v26, %v28
    %v32 = vunpack.c.l.s4 1966171168
    %v33 = vunpack.c.0.s8 %v32
    %v34 = vlaneseq
    %v35 = vshrl.u32 %v34, 7
    %v36 = vsub.s32 %v33, %v35
    %v37 = vrot.slane %v29, %v36
    %v38 = vcombine.high %v37, %v37
    %v40 = vunpack.c.l.s4 1966171168
    %v41 = vunpack.c.0.s8 %v40
    %v42 = vlaneseq
    %v43 = vshrl.u32 %v42, 7
    %v44 = vsub.s32 %v41, %v43
    %v45 = vrot.slane %v37, %v44
    %v47 = vunpack.c.l.s4 1966171168
    %v48 = vunpack.c.0.s8 %v47
    %v49 = vlaneseq
    %v50 = vshrl.u32 %v49, 7
    %v51 = vsub.s32 %v48, %v50
    %v52 = vrot.slane %v38, %v51
    %vm55 = vcmask 253952
    %56 = vst.msk [vmem:[#allocation5] sm:$0x1] %vm55, %v45
    %57 = vst.msk [vmem:[#allocation5 + $0x2] sm:$0x1] %vm55, %v52
    %v58 = vld [vmem:[%s1] sm:$0x3]
    %v61 = vunpack.c.l.s4 1966171168
    %v62 = vunpack.c.0.s8 %v61
    %v63 = vlaneseq
    %v64 = vshrl.u32 %v63, 7
    %v65 = vsub.s32 %v62, %v64
    %v66 = vrot.slane %v58, %v65
    %v67 = vcombine.high %v66, %v66
    %v69 = vunpack.c.l.s4 1966171168
    %v70 = vunpack.c.0.s8 %v69
    %v71 = vlaneseq
    %v72 = vshrl.u32 %v71, 7
    %v73 = vsub.s32 %v70, %v72
    %v74 = vrot.slane %v66, %v73
    %v76 = vunpack.c.l.s4 1966171168
    %v77 = vunpack.c.0.s8 %v76
    %v78 = vlaneseq
    %v79 = vshrl.u32 %v78, 7
    %v80 = vsub.s32 %v77, %v79
    %v81 = vrot.slane %v67, %v80
    %84 = vst.msk [vmem:[#allocation5 + $0x1] sm:$0x1] %vm55, %v74
    %85 = vst.msk [vmem:[#allocation5 + $0x3] sm:$0x1] %vm55, %v81
    // Predicated region
    $region14: #{tpu_custom_call.1} parent=1 // pred_check
      _
    $region15: #{tpu_custom_call.1} parent=1 // pred_check_branch
      %87 = sbr.rel (0) target = $region17
    $region16: #{tpu_custom_call.1} parent=1 // pred_region
      %s89 = ssub.s32 64, 64
      %90 = vsyncadd [#allocation4], %s89
      %s91 = sshll.u32 [#allocation5], 4
      %s92 = int_to_ptr.vmem [resolvable:$true] %s91
      %97 = dma.vmem_to_hbm [thread:$0]  %s92, 64, %s2, [#allocation4], 32, 32, 2
    $region17: #{tpu_custom_call.1} parent=1 // pred_fallthru
      _
    // Predicated region
    $region18: #{tpu_custom_call.1} parent=1 // pred_check
      _
    $region19: #{tpu_custom_call.1} parent=1 // pred_check_branch
      %99 = sbr.rel (0) target = $region21
    $region20: #{tpu_custom_call.1} parent=1 // pred_region
      %100 = dma.done [#allocation4], 64
    $region21: #{tpu_custom_call.1} parent=1 // pred_fallthru
      _
    %101 = vsyncpa [#allocation3], 1
    %102 = vsyncpa [#allocation4], 1

</llo_original>
